<compile_context>
chip_gen: v7x
topology: tpu7x:2x2x1
jax: 0.10.0
libtpu: 0.0.40
codegen_flags: <defaults>
</compile_context>

<pallas_src>
import functools

import jax
import jax.numpy as jnp
from jax import lax
from jax.experimental import pallas as pl
from jax.experimental.pallas import tpu as pltpu


def _round_up(x, m):
    return (x + m - 1) // m * m


def _erf(x):
    # Abramowitz & Stegun 7.1.26 rational approximation of erf (|err| < 1.5e-7).
    # exp and the approx reciprocal both run on the EUP; the rest is VPU work.
    # TODO(synk): switch to lax.erf once an exact erf lowering is guaranteed in Mosaic.
    p = 0.3275911
    a1, a2, a3, a4, a5 = (0.254829592, -0.284496736, 1.421413741,
                          -1.453152027, 1.061405429)
    s = jnp.where(x >= 0.0, 1.0, -1.0)
    z = jnp.abs(x)
    t = pl.reciprocal(1.0 + p * z, approx=True)
    poly = t * (a1 + t * (a2 + t * (a3 + t * (a4 + t * a5))))
    return s * (1.0 - poly * jnp.exp(-z * z))


def _gelu(x):
    # exact (erf-based) GELU, matching torch.nn.GELU() default
    return 0.5 * x * (1.0 + _erf(x * 0.7071067811865476))


def _embed_fc_kernel(x_ref, w1_ref, b1_ref, w2_ref, b2_ref, o_ref):
    # Linear 1 on the MXU: bf16 operands, f32 accumulate.
    h = jnp.dot(x_ref[...], w1_ref[...], preferred_element_type=jnp.float32)
    # bias + exact GELU in f32 on VPU/EUP.
    h = _gelu(h + b1_ref[...])
    # Linear 2 on the MXU: cast hidden to bf16 for the MXU push, f32 accumulate,
    # bias add, lane-dense (multiple-of-128) store.
    y = jnp.dot(h.astype(jnp.bfloat16), w2_ref[...],
                preferred_element_type=jnp.float32) + b2_ref[...]
    o_ref[...] = y.astype(o_ref.dtype)


def prepare_embed_fc_params(w1, b1, w2, b2):
    """One-time parameter prep (hoisted out of the per-call path).

    PyTorch layout in:  w1 (emb_dim, input_dim), b1 (emb_dim,),
                        w2 (emb_dim, emb_dim),   b2 (emb_dim,)
    Returns ((w1p, b1p, w2p, b2p), input_dim, emb_dim) with weights transposed,
    zero-padded to lane-dense (multiple-of-128) output dims, and cast to bf16.
    Zero padding is exact: gelu(0) = 0 and padded weight rows/cols are 0.
    """
    emb_dim, input_dim = w1.shape
    demb_p = _round_up(emb_dim, 128)

    w1p = jnp.zeros((input_dim, demb_p), jnp.bfloat16)
    w1p = w1p.at[:, :emb_dim].set(w1.T.astype(jnp.bfloat16))
    w2p = jnp.zeros((demb_p, demb_p), jnp.bfloat16)
    w2p = w2p.at[:emb_dim, :emb_dim].set(w2.T.astype(jnp.bfloat16))
    b1p = jnp.zeros((1, demb_p), jnp.float32).at[0, :emb_dim].set(
        b1.astype(jnp.float32))
    b2p = jnp.zeros((1, demb_p), jnp.float32).at[0, :emb_dim].set(
        b2.astype(jnp.float32))
    return (w1p, b1p, w2p, b2p), int(input_dim), int(emb_dim)


@functools.partial(jax.jit, static_argnames=("input_dim", "emb_dim"))
def embed_fc(x, padded_params, *, input_dim, emb_dim):
    """EmbedFC forward. x: any shape with x.size % input_dim == 0.

    padded_params comes from prepare_embed_fc_params(); returns (B, emb_dim)
    f32 where B = x.size // input_dim (matches x.view(-1, input_dim)).
    """
    w1p, b1p, w2p, b2p = padded_params
    din = input_dim
    demb_p = w2p.shape[1]

    # x.view(-1, input_dim); feature dim stays UNpadded (block == full dim).
    x2 = x.reshape(-1, din)
    B = x2.shape[0]

    # Row tile: multiple of 16 (bf16 sublane packing), capped at 512.
    tm = min(_round_up(B, 16), 512)
    b_p = _round_up(B, tm)

    if b_p == B:
        xp = x2.astype(jnp.bfloat16)
    else:
        xp = jnp.zeros((b_p, din), jnp.bfloat16).at[:B, :].set(
            x2.astype(jnp.bfloat16))

    # VMEM budget: double-buffered x/out tiles + single-buffered weights +
    # headroom for the f32 hidden tile; bounded by 64 MiB (v7x per-TC physical).
    nbytes_const = din * demb_p * 2 + demb_p * demb_p * 2 + 2 * demb_p * 4
    nbytes_stream = 2 * (tm * din * 2 + tm * demb_p * 4)
    nbytes_work = 2 * tm * demb_p * 4
    vmem_limit = int(min(64 * 1024 * 1024,
                         max(16 * 1024 * 1024,
                             2 * (nbytes_const + nbytes_stream + nbytes_work))))

    cost = pl.CostEstimate(
        flops=2 * b_p * (din * demb_p + demb_p * demb_p),
        transcendentals=2 * b_p * demb_p,           # exp + reciprocal per hidden elem
        bytes_accessed=int(b_p * din * 2 + nbytes_const + b_p * demb_p * 4),
    )

    grid = (b_p // tm,)
    out = pl.pallas_call(
        _embed_fc_kernel,
        out_shape=jax.ShapeDtypeStruct((b_p, demb_p), jnp.float32),
        grid_spec=pltpu.PrefetchScalarGridSpec(
            num_scalar_prefetch=0,
            grid=grid,
            in_specs=[
                # x row tile (feature dim = full array dim -> legal, no lane padding)
                pl.BlockSpec((tm, din), lambda i: (i, 0)),
                # resident constants: single-buffered (index_map never changes)
                pl.BlockSpec((din, demb_p), lambda i: (0, 0),
                             pipeline_mode=pl.Buffered(1)),
                pl.BlockSpec((1, demb_p), lambda i: (0, 0),
                             pipeline_mode=pl.Buffered(1)),
                pl.BlockSpec((demb_p, demb_p), lambda i: (0, 0),
                             pipeline_mode=pl.Buffered(1)),
                pl.BlockSpec((1, demb_p), lambda i: (0, 0),
                             pipeline_mode=pl.Buffered(1)),
            ],
            out_specs=pl.BlockSpec((tm, demb_p), lambda i: (i, 0)),
        ),
        compiler_params=pltpu.CompilerParams(
            dimension_semantics=("parallel",),
            vmem_limit_bytes=vmem_limit),
        cost_estimate=cost,
    )(xp, w1p, b1p, w2p, b2p)

    # strip padding back off
    return out[:B, :emb_dim]


def _reference(x, params):
    """Pure-JAX f32 reference of the PyTorch forward (for sanity checking)."""
    w1, b1, w2, b2 = params
    xf = x.reshape(-1, w1.shape[1]).astype(jnp.float32)
    h = jnp.dot(xf, w1.T, precision=lax.Precision.HIGHEST) + b1
    h = 0.5 * h * (1.0 + lax.erf(h * 0.7071067811865476))
    return jnp.dot(h, w2.T, precision=lax.Precision.HIGHEST) + b2


if __name__ == "__main__":
    input_dim, emb_dim = 4, 32
    key = jax.random.PRNGKey(0)
    ks = jax.random.split(key, 5)

    # x as the diffusion-model usage implies (conditioning vector per sample);
    # forward flattens it with view(-1, input_dim).
    x = jax.random.normal(ks[0], (2, input_dim, 1, 1), jnp.float32)

    # deterministic synthetic parameters (PyTorch Linear default-init ranges)
    lim1 = 1.0 / (input_dim ** 0.5)
    lim2 = 1.0 / (emb_dim ** 0.5)
    w1 = jax.random.uniform(ks[1], (emb_dim, input_dim), jnp.float32, -lim1, lim1)
    b1 = jax.random.uniform(ks[2], (emb_dim,), jnp.float32, -lim1, lim1)
    w2 = jax.random.uniform(ks[3], (emb_dim, emb_dim), jnp.float32, -lim2, lim2)
    b2 = jax.random.uniform(ks[4], (emb_dim,), jnp.float32, -lim2, lim2)

    # One-time parameter prep (hoisted out of the per-call path).
    padded_params, din, demb = prepare_embed_fc_params(w1, b1, w2, b2)

    out = embed_fc(x, padded_params, input_dim=din, emb_dim=demb)
    out = jax.block_until_ready(out)
    assert out.shape == (2, emb_dim), out.shape

    ref = _reference(x, (w1, b1, w2, b2))
    # bf16 MXU operands (f32 accumulate) -> compare at bf16-appropriate tolerance.
    assert jnp.allclose(out, ref, atol=2e-2, rtol=2e-2), float(
        jnp.max(jnp.abs(out - ref)))

    print("KERNEL_OK")
</pallas_src>

<mosaic_0001>
module attributes {stable_mosaic.version = 11 : i64} {
  func.func @_embed_fc_kernel(%arg0: i32, %arg1: memref<16x4xbf16, #tpu.memory_space<vmem>>, %arg2: memref<4x128xbf16, #tpu.memory_space<vmem>>, %arg3: memref<1x128xf32, #tpu.memory_space<vmem>>, %arg4: memref<128x128xbf16, #tpu.memory_space<vmem>>, %arg5: memref<1x128xf32, #tpu.memory_space<vmem>>, %arg6: memref<16x128xf32, #tpu.memory_space<vmem>>) attributes {dimension_semantics = [#tpu.dimension_semantics<parallel>], iteration_bounds = array<i64: 1>, scalar_prefetch = 0 : i64, scratch_operands = 0 : i64, tpu.core_type = #tpu.core_type<tc>, window_params = [{transform_indices = @transform_0, window_bounds = array<i64: 16, 4>}, {pipeline_mode = #tpu.pipeline_mode<synchronous>, transform_indices = @transform_1, window_bounds = array<i64: 4, 128>}, {pipeline_mode = #tpu.pipeline_mode<synchronous>, transform_indices = @transform_2, window_bounds = array<i64: 1, 128>}, {pipeline_mode = #tpu.pipeline_mode<synchronous>, transform_indices = @transform_3, window_bounds = array<i64: 128, 128>}, {pipeline_mode = #tpu.pipeline_mode<synchronous>, transform_indices = @transform_4, window_bounds = array<i64: 1, 128>}, {transform_indices = @transform_5, window_bounds = array<i64: 16, 128>}]} {
    %c0 = arith.constant 0 : index
    %c0_0 = arith.constant 0 : index
    %0 = vector.load %arg1[%c0, %c0_0] : memref<16x4xbf16, #tpu.memory_space<vmem>>, vector<16x4xbf16>
    %c0_1 = arith.constant 0 : index
    %c0_2 = arith.constant 0 : index
    %1 = vector.load %arg2[%c0_1, %c0_2] : memref<4x128xbf16, #tpu.memory_space<vmem>>, vector<4x128xbf16>
    %cst = arith.constant dense<0.000000e+00> : vector<16x128xf32>
    %2 = tpu.matmul %0, %1, %cst {dimension_numbers = #tpu.dot_dimension_numbers<[1], [0], [0], [1], [0, 0, 1, 1], [], []>} : vector<16x4xbf16>, vector<4x128xbf16>, vector<16x128xf32> -> vector<16x128xf32>
    %c0_3 = arith.constant 0 : index
    %c0_4 = arith.constant 0 : index
    %3 = vector.load %arg3[%c0_3, %c0_4] : memref<1x128xf32, #tpu.memory_space<vmem>>, vector<1x128xf32>
    %4 = vector.broadcast %3 : vector<1x128xf32> to vector<16x128xf32>
    %5 = arith.addf %2, %4 : vector<16x128xf32>
    %cst_5 = arith.constant 5.000000e-01 : f32
    %6 = vector.broadcast %cst_5 : f32 to vector<16x128xf32>
    %7 = arith.mulf %6, %5 : vector<16x128xf32>
    %cst_6 = arith.constant 0.707106769 : f32
    %8 = vector.broadcast %cst_6 : f32 to vector<16x128xf32>
    %9 = arith.mulf %5, %8 : vector<16x128xf32>
    %cst_7 = arith.constant 0.000000e+00 : f32
    %10 = vector.broadcast %cst_7 : f32 to vector<16x128xf32>
    %11 = arith.cmpf oge, %9, %10 : vector<16x128xf32>
    %cst_8 = arith.constant 1.000000e+00 : f32
    %cst_9 = arith.constant -1.000000e+00 : f32
    %12 = vector.broadcast %cst_8 : f32 to vector<16x128xf32>
    %13 = vector.broadcast %cst_9 : f32 to vector<16x128xf32>
    %14 = arith.select %11, %12, %13 : vector<16x128xi1>, vector<16x128xf32>
    %15 = math.absf %9 : vector<16x128xf32>
    %cst_10 = arith.constant 0.327591091 : f32
    %16 = vector.broadcast %cst_10 : f32 to vector<16x128xf32>
    %17 = arith.mulf %16, %15 : vector<16x128xf32>
    %cst_11 = arith.constant 1.000000e+00 : f32
    %18 = vector.broadcast %cst_11 : f32 to vector<16x128xf32>
    %19 = arith.addf %18, %17 : vector<16x128xf32>
    %20 = tpu.reciprocal %19 {approx = true} : vector<16x128xf32> -> vector<16x128xf32>
    %cst_12 = arith.constant 1.06140542 : f32
    %21 = vector.broadcast %cst_12 : f32 to vector<16x128xf32>
    %22 = arith.mulf %20, %21 : vector<16x128xf32>
    %cst_13 = arith.constant -1.45315206 : f32
    %23 = vector.broadcast %cst_13 : f32 to vector<16x128xf32>
    %24 = arith.addf %23, %22 : vector<16x128xf32>
    %25 = arith.mulf %20, %24 : vector<16x128xf32>
    %cst_14 = arith.constant 1.42141378 : f32
    %26 = vector.broadcast %cst_14 : f32 to vector<16x128xf32>
    %27 = arith.addf %26, %25 : vector<16x128xf32>
    %28 = arith.mulf %20, %27 : vector<16x128xf32>
    %cst_15 = arith.constant -0.284496725 : f32
    %29 = vector.broadcast %cst_15 : f32 to vector<16x128xf32>
    %30 = arith.addf %29, %28 : vector<16x128xf32>
    %31 = arith.mulf %20, %30 : vector<16x128xf32>
    %cst_16 = arith.constant 0.254829586 : f32
    %32 = vector.broadcast %cst_16 : f32 to vector<16x128xf32>
    %33 = arith.addf %32, %31 : vector<16x128xf32>
    %34 = arith.mulf %20, %33 : vector<16x128xf32>
    %cst_17 = arith.constant 0.000000e+00 : f32
    %35 = vector.broadcast %cst_17 : f32 to vector<16x128xf32>
    %36 = arith.subf %35, %15 : vector<16x128xf32>
    %37 = arith.mulf %36, %15 : vector<16x128xf32>
    %38 = math.exp %37 : vector<16x128xf32>
    %39 = arith.mulf %34, %38 : vector<16x128xf32>
    %cst_18 = arith.constant 1.000000e+00 : f32
    %40 = vector.broadcast %cst_18 : f32 to vector<16x128xf32>
    %41 = arith.subf %40, %39 : vector<16x128xf32>
    %42 = arith.mulf %14, %41 : vector<16x128xf32>
    %cst_19 = arith.constant 1.000000e+00 : f32
    %43 = vector.broadcast %cst_19 : f32 to vector<16x128xf32>
    %44 = arith.addf %43, %42 : vector<16x128xf32>
    %45 = arith.mulf %7, %44 : vector<16x128xf32>
    %46 = arith.truncf %45 : vector<16x128xf32> to vector<16x128xbf16>
    %c0_20 = arith.constant 0 : index
    %c0_21 = arith.constant 0 : index
    %47 = vector.load %arg4[%c0_20, %c0_21] : memref<128x128xbf16, #tpu.memory_space<vmem>>, vector<128x128xbf16>
    %cst_22 = arith.constant dense<0.000000e+00> : vector<16x128xf32>
    %48 = tpu.matmul %46, %47, %cst_22 {dimension_numbers = #tpu.dot_dimension_numbers<[1], [0], [0], [1], [0, 0, 1, 1], [], []>} : vector<16x128xbf16>, vector<128x128xbf16>, vector<16x128xf32> -> vector<16x128xf32>
    %c0_23 = arith.constant 0 : index
    %c0_24 = arith.constant 0 : index
    %49 = vector.load %arg5[%c0_23, %c0_24] : memref<1x128xf32, #tpu.memory_space<vmem>>, vector<1x128xf32>
    %50 = vector.broadcast %49 : vector<1x128xf32> to vector<16x128xf32>
    %51 = arith.addf %48, %50 : vector<16x128xf32>
    %c0_25 = arith.constant 0 : index
    %c0_26 = arith.constant 0 : index
    %52 = vector.load %arg6[%c0_25, %c0_26] : memref<16x128xf32, #tpu.memory_space<vmem>>, vector<16x128xf32>
    tpu.vector_store %arg6[%c0_25, %c0_26], %51 {strides = array<i32>} : memref<16x128xf32, #tpu.memory_space<vmem>>, vector<16x128xf32>,
    return
  }
  func.func @transform_0(%arg0: i32) -> (i32, i32) {
    %c0_i32 = arith.constant 0 : i32
    %c0_i32_0 = arith.constant 0 : i32
    return %arg0, %c0_i32 : i32, i32
  }
  func.func @transform_1(%arg0: i32) -> (i32, i32) {
    %c0_i32 = arith.constant 0 : i32
    %c0_i32_0 = arith.constant 0 : i32
    %c0_i32_1 = arith.constant 0 : i32
    return %c0_i32, %c0_i32_0 : i32, i32
  }
  func.func @transform_2(%arg0: i32) -> (i32, i32) {
    %c0_i32 = arith.constant 0 : i32
    %c0_i32_0 = arith.constant 0 : i32
    %c0_i32_1 = arith.constant 0 : i32
    return %c0_i32, %c0_i32_0 : i32, i32
  }
  func.func @transform_3(%arg0: i32) -> (i32, i32) {
    %c0_i32 = arith.constant 0 : i32
    %c0_i32_0 = arith.constant 0 : i32
    %c0_i32_1 = arith.constant 0 : i32
    return %c0_i32, %c0_i32_0 : i32, i32
  }
  func.func @transform_4(%arg0: i32) -> (i32, i32) {
    %c0_i32 = arith.constant 0 : i32
    %c0_i32_0 = arith.constant 0 : i32
    %c0_i32_1 = arith.constant 0 : i32
    return %c0_i32, %c0_i32_0 : i32, i32
  }
  func.func @transform_5(%arg0: i32) -> (i32, i32) {
    %c0_i32 = arith.constant 0 : i32
    %c0_i32_0 = arith.constant 0 : i32
    return %arg0, %c0_i32 : i32, i32
  }
}

</mosaic_0001>

<llo_original>
// kernel: embed_fc.1
$region0: #{embed_fc.1}
  #allocation0 [shape = 'u32[]', space=smem, size = 0x4, offset = 0x4, fixed_abs, tag = 'smem constant byte address 0x4 - core index']
  #allocation1 [shape = 'u32[144,128]{1,0:T(1,128)}', space=vmem, size = 0x12000, scoped, tag = 'internal scratch']
  %s0 = inlined_call_operand.vmem [shape: bf16[16,4], index: 0, kind: input, shape index: {}]
  %s1 = inlined_call_operand.vmem [shape: bf16[4,128], index: 1, kind: input, shape index: {}]
  %s2 = inlined_call_operand.vmem [shape: f32[1,128], index: 2, kind: input, shape index: {}]
  %s3 = inlined_call_operand.hbm [shape: bf16[128,128], index: 3, kind: input, shape index: {}]
  %s4 = inlined_call_operand.vmem [shape: f32[1,128], index: 4, kind: input, shape index: {}]
  %s5 = inlined_call_operand.vmem [shape: f32[16,128], index: 5, kind: output, shape index: {}]
  %s6 = sld [smem:[#allocation0]]
  $region34: #{embed_fc.1} parent=0
    _
  %s8 = ssub.s32 1, %s6
  %s9 = scalar_select 0, %s8, %s6
  $region1: #{embed_fc.1} parent=0
    #allocation2 [shape = 'u8[32768]{0}', space=vmem, size = 0x8000, scoped, tag = 'input window, operand 3, single buffered']
    #allocation3 [shape = 's32[1]{0}', space=sflag, size = 0x4, scoped, tag = 'scoped memory for embed_fc.1']
    %10 = vsyncpa [#allocation3], 0
    // Predicated region
    $region2: #{embed_fc.1} parent=1 // pred_check
      _
    $region3: #{embed_fc.1} parent=1 // pred_check_branch
      %12 = sbr.rel (0) target = $region5
    $region4: #{embed_fc.1} parent=1 // pred_region
      _
    $region5: #{embed_fc.1} parent=1 // pred_fallthru
      _
    // Predicated region
    $region6: #{embed_fc.1} parent=1 // pred_check
      _
    $region7: #{embed_fc.1} parent=1 // pred_check_branch
      %14 = sbr.rel (0) target = $region9
    $region8: #{embed_fc.1} parent=1 // pred_region
      _
    $region9: #{embed_fc.1} parent=1 // pred_fallthru
      _
    // Predicated region
    $region10: #{embed_fc.1} parent=1 // pred_check
      _
    $region11: #{embed_fc.1} parent=1 // pred_check_branch
      %16 = sbr.rel (0) target = $region13
    $region12: #{embed_fc.1} parent=1 // pred_region
      _
    $region13: #{embed_fc.1} parent=1 // pred_fallthru
      _
    // Predicated region
    $region14: #{embed_fc.1} parent=1 // pred_check
      _
    $region15: #{embed_fc.1} parent=1 // pred_check_branch
      %18 = sbr.rel (0) target = $region17
    $region16: #{embed_fc.1} parent=1 // pred_region
      %s20 = ssub.s32 1024, 1024
      %21 = vsyncadd [#allocation3], %s20
      %s22 = sshll.u32 [#allocation2], 4
      %s23 = int_to_ptr.vmem [resolvable:$true] %s22
      %28 = dma.hbm_to_vmem [thread:$0]  %s3, 1024, %s23, [#allocation3], 64, 64, 4
    $region17: #{embed_fc.1} parent=1 // pred_fallthru
      _
    // Predicated region
    $region18: #{embed_fc.1} parent=1 // pred_check
      _
    $region19: #{embed_fc.1} parent=1 // pred_check_branch
      %30 = sbr.rel (0) target = $region21
    $region20: #{embed_fc.1} parent=1 // pred_region
      _
    $region21: #{embed_fc.1} parent=1 // pred_fallthru
      _
    // Predicated region
    $region22: #{embed_fc.1} parent=1 // pred_check
      _
    $region23: #{embed_fc.1} parent=1 // pred_check_branch
      %32 = sbr.rel (0) target = $region25
    $region24: #{embed_fc.1} parent=1 // pred_region
      %33 = dma.done [#allocation3], 1024
    $region25: #{embed_fc.1} parent=1 // pred_fallthru
      _
    %v35 = vld [vmem:[%s0] sm:$0xf]
    %v36 = vld [vmem:[%s0 + $0x4] sm:$0xf]
    %v37 = vld [vmem:[%s1] sm:$0x3]
    %v38 = vld [vmem:[%s2] sm:$0x1]
    %v40 = vlaneseq
    %v41 = vshrl.u32 %v40, 7
    %v42 = vsub.s32 0, %v41
    %v43 = vrot.slane %v38, %v42
    %v47 = vunpack.c.l.b16 %v35
    %v48 = vunpack.c.l.b16 %v36
    %v49 = vpack.c.b16 %v48, %v47
    %vm50 = vcmask 31744
    %v52 = vsel %vm50, %v49, 0
    %vm54 = vcmask 1041408
    %v56 = vsel %vm54, %v37, 0
    %58 = vmatprep.subr.bf16.mxu0 0
    %59 = vmatpush1.bf16.msra.mxu0 %v56
    %60 = vmatprep.subr.bf16.mxu0 0
    %61 = vmatpush1.bf16.msra.mxu0 0
    %62 = vmatprep.subr.bf16.mxu0 0
    %63 = vmatpush1.bf16.msra.mxu0 0
    %64 = vmatprep.subr.bf16.mxu0 0
    %65 = vmatpush1.bf16.msra.mxu0 0
    %66 = vmatprep.subr.bf16.mxu0 0
    %67 = vmatpush1.bf16.msra.mxu0 0
    %68 = vmatprep.subr.bf16.mxu0 0
    %69 = vmatpush1.bf16.msra.mxu0 0
    %70 = vmatprep.subr.bf16.mxu0 0
    %71 = vmatpush1.bf16.msra.mxu0 0
    %72 = vmatprep.subr.bf16.mxu0 0
    %73 = vmatpush1.bf16.msra.mxu0 0
    %74 = vmatprep.subr.bf16.mxu0 0
    %75 = vmatpush1.bf16.msra.mxu0 0
    %76 = vmatprep.subr.bf16.mxu0 0
    %77 = vmatpush1.bf16.msra.mxu0 0
    %78 = vmatprep.subr.bf16.mxu0 0
    %79 = vmatpush1.bf16.msra.mxu0 0
    %80 = vmatprep.subr.bf16.mxu0 0
    %81 = vmatpush1.bf16.msra.mxu0 0
    %82 = vmatprep.subr.bf16.mxu0 0
    %83 = vmatpush1.bf16.msra.mxu0 0
    %84 = vmatprep.subr.bf16.mxu0 0
    %85 = vmatpush1.bf16.msra.mxu0 0
    %86 = vmatprep.subr.bf16.mxu0 0
    %87 = vmatpush1.bf16.msra.mxu0 0
    %88 = vmatprep.subr.bf16.mxu0 0
    %89 = vmatpush1.bf16.msra.mxu0 0
    %90 = vmatprep.mubr.bf16.mxu0 0
    %91 = vmatmul.mubr.bf16.gmra.mrb[0].mxu0 %v52
    %v92 = vpop.f32.mrb[0].mxu0
    %v93 = vadd.f32 %v43, %v92
    %v94 = vpop.f32.mrb[0].mxu0
    %v95 = vpop.f32.mrb[0].mxu0
    %v96 = vadd.f32 %v43, %v95
    %v97 = vpop.f32.mrb[0].mxu0
    %98 = vdwg.mxu0
    %v99 = vmul.f32 %v93, 0.5
    %v100 = vmul.f32 %v96, 0.5
    %v101 = vmul.f32 %v93, 0.70710677
    %v102 = vmul.f32 %v96, 0.70710677
    %vm103 = vcmp.ge.f32.partialorder %v101, 0.0
    %vm104 = vcmp.ge.f32.partialorder %v102, 0.0
    %v105 = vsel %vm103, 1.0, -1.0
    %v106 = vsel %vm104, 1.0, -1.0
    %v107 = vand.u32 2147483647, %v101
    %v108 = vand.u32 2147483647, %v102
    %v109 = vmul.f32 %v107, 0.3275911
    %v110 = vmul.f32 %v108, 0.3275911
    %v111 = vadd.f32 %v109, 1.0
    %v112 = vadd.f32 %v110, 1.0
    %v113 = vrcp.pop %v111
    %v114 = vrcp.pop %v112
    %v115 = vmul.f32 %v113, 1.0614054
    %v116 = vmul.f32 %v114, 1.0614054
    %v117 = vadd.f32 %v115, -1.4531521
    %v118 = vadd.f32 %v116, -1.4531521
    %v119 = vmul.f32 %v113, %v117
    %v120 = vmul.f32 %v114, %v118
    %v121 = vadd.f32 %v119, 1.4214138
    %v122 = vadd.f32 %v120, 1.4214138
    %v123 = vmul.f32 %v113, %v121
    %v124 = vmul.f32 %v114, %v122
    %v125 = vadd.f32 %v123, -0.28449672
    %v126 = vadd.f32 %v124, -0.28449672
    %v127 = vmul.f32 %v113, %v125
    %v128 = vmul.f32 %v114, %v126
    %v129 = vadd.f32 %v127, 0.2548296
    %v130 = vadd.f32 %v128, 0.2548296
    %v131 = vmul.f32 %v113, %v129
    %v132 = vmul.f32 %v114, %v130
    %v133 = vsub.f32 0.0, %v107
    %v134 = vsub.f32 0.0, %v108
    %v135 = vmul.f32 %v133, %v107
    %v136 = vmul.f32 %v134, %v108
    %v137 = vmul.f32 %v135, 1.442695
    %v138 = vpow.pop %v137
    %v139 = vmul.f32 %v136, 1.442695
    %v140 = vpow.pop %v139
    %v141 = vmul.f32 %v131, %v138
    %v142 = vmul.f32 %v132, %v140
    %v143 = vsub.f32 1.0, %v141
    %v144 = vsub.f32 1.0, %v142
    %v145 = vmul.f32 %v105, %v143
    %v146 = vmul.f32 %v106, %v144
    %v147 = vadd.f32 %v145, 1.0
    %v148 = vadd.f32 %v146, 1.0
    %v149 = vmul.f32 %v99, %v147
    %v150 = vmul.f32 %v100, %v148
    %v151 = vpack.c.bf16 %v150, %v149
    %v152 = vld [vmem:[#allocation2] sm:$0xf]
    %v153 = vld [vmem:[#allocation2 + $0x4] sm:$0xf]
    %v154 = vld [vmem:[#allocation2 + $0x8] sm:$0xf]
    %v155 = vld [vmem:[#allocation2 + $0xc] sm:$0xf]
    %v156 = vld [vmem:[#allocation2 + $0x10] sm:$0xf]
    %v157 = vld [vmem:[#allocation2 + $0x14] sm:$0xf]
    %v158 = vld [vmem:[#allocation2 + $0x18] sm:$0xf]
    %v159 = vld [vmem:[#allocation2 + $0x1c] sm:$0xf]
    %v160 = vld [vmem:[#allocation2 + $0x20] sm:$0xf]
    %v161 = vld [vmem:[#allocation2 + $0x24] sm:$0xf]
    %v162 = vld [vmem:[#allocation2 + $0x28] sm:$0xf]
    %v163 = vld [vmem:[#allocation2 + $0x2c] sm:$0xf]
    %v164 = vld [vmem:[#allocation2 + $0x30] sm:$0xf]
    %v165 = vld [vmem:[#allocation2 + $0x34] sm:$0xf]
    %v166 = vld [vmem:[#allocation2 + $0x38] sm:$0xf]
    %v167 = vld [vmem:[#allocation2 + $0x3c] sm:$0xf]
    %v168 = vld [vmem:[%s4] sm:$0x1]
    %v170 = vlaneseq
    %v171 = vshrl.u32 %v170, 7
    %v172 = vsub.s32 0, %v171
    %v173 = vrot.slane %v168, %v172
    %v191 = vunpack.c.l.b16 %v152
    %v192 = vunpack.c.l.b16 %v153
    %v193 = vunpack.c.l.b16 %v154
    %v194 = vunpack.c.l.b16 %v155
    %v195 = vunpack.c.l.b16 %v156
    %v196 = vunpack.c.l.b16 %v157
    %v197 = vunpack.c.l.b16 %v158
    %v198 = vunpack.c.l.b16 %v159
    %v199 = vunpack.c.l.b16 %v160
    %v200 = vunpack.c.l.b16 %v161
    %v201 = vunpack.c.l.b16 %v162
    %v202 = vunpack.c.l.b16 %v163
    %v203 = vunpack.c.l.b16 %v164
    %v204 = vunpack.c.l.b16 %v165
    %v205 = vunpack.c.l.b16 %v166
    %v206 = vunpack.c.l.b16 %v167
    %v207 = vpack.c.b16 %v192, %v191
    %v208 = vpack.c.b16 %v194, %v193
    %v209 = vpack.c.b16 %v196, %v195
    %v210 = vpack.c.b16 %v198, %v197
    %v211 = vpack.c.b16 %v200, %v199
    %v212 = vpack.c.b16 %v202, %v201
    %v213 = vpack.c.b16 %v204, %v203
    %v214 = vpack.c.b16 %v206, %v205
    %223 = vmatprep.subr.bf16.mxu0 0
    %224 = vmatpush1.bf16.msra.mxu0 %v207
    %225 = vmatprep.subr.bf16.mxu0 0
    %226 = vmatpush1.bf16.msra.mxu0 %v208
    %227 = vmatprep.subr.bf16.mxu0 0
    %228 = vmatpush1.bf16.msra.mxu0 %v209
    %229 = vmatprep.subr.bf16.mxu0 0
    %230 = vmatpush1.bf16.msra.mxu0 %v210
    %231 = vmatprep.subr.bf16.mxu0 0
    %232 = vmatpush1.bf16.msra.mxu0 %v211
    %233 = vmatprep.subr.bf16.mxu0 0
    %234 = vmatpush1.bf16.msra.mxu0 %v212
    %235 = vmatprep.subr.bf16.mxu0 0
    %236 = vmatpush1.bf16.msra.mxu0 %v213
    %237 = vmatprep.subr.bf16.mxu0 0
    %238 = vmatpush1.bf16.msra.mxu0 %v214
    %239 = vmatprep.subr.bf16.mxu0 0
    %240 = vmatpush1.bf16.msra.mxu0 0
    %241 = vmatprep.subr.bf16.mxu0 0
    %242 = vmatpush1.bf16.msra.mxu0 0
    %243 = vmatprep.subr.bf16.mxu0 0
    %244 = vmatpush1.bf16.msra.mxu0 0
    %245 = vmatprep.subr.bf16.mxu0 0
    %246 = vmatpush1.bf16.msra.mxu0 0
    %247 = vmatprep.subr.bf16.mxu0 0
    %248 = vmatpush1.bf16.msra.mxu0 0
    %249 = vmatprep.subr.bf16.mxu0 0
    %250 = vmatpush1.bf16.msra.mxu0 0
    %251 = vmatprep.subr.bf16.mxu0 0
    %252 = vmatpush1.bf16.msra.mxu0 0
    %253 = vmatprep.subr.bf16.mxu0 0
    %254 = vmatpush1.bf16.msra.mxu0 0
    %255 = vmatprep.mubr.bf16.mxu0 0
    %256 = vmatmul.mubr.bf16.gmra.mrb[0].mxu0 %v151
    %v257 = vpop.f32.mrb[0].mxu0
    %v258 = vadd.f32 %v173, %v257
    %v259 = vpop.f32.mrb[0].mxu0
    %v260 = vpop.f32.mrb[0].mxu0
    %v261 = vadd.f32 %v173, %v260
    %v262 = vpop.f32.mrb[0].mxu0
    %263 = vdwg.mxu0
    %264 = vst [vmem:[%s5] sm:$0xff] %v258
    %265 = vst [vmem:[%s5 + $0x8] sm:$0xff] %v261
    // Predicated region
    $region26: #{embed_fc.1} parent=1 // pred_check
      _
    $region27: #{embed_fc.1} parent=1 // pred_check_branch
      %267 = sbr.rel (0) target = $region29
    $region28: #{embed_fc.1} parent=1 // pred_region
      _
    $region29: #{embed_fc.1} parent=1 // pred_fallthru
      _
    // Predicated region
    $region30: #{embed_fc.1} parent=1 // pred_check
      _
    $region31: #{embed_fc.1} parent=1 // pred_check_branch
      %269 = sbr.rel (0) target = $region33
    $region32: #{embed_fc.1} parent=1 // pred_region
      _
    $region33: #{embed_fc.1} parent=1 // pred_fallthru
      _
    %270 = vsyncpa [#allocation3], 1

</llo_original>
